<compile_context>
chip_gen: v6e
topology: v6e:2x2x1
jax: 0.10.0
libtpu: 0.0.40
codegen_flags: <defaults>
</compile_context>

<pallas_src>
import functools
import math

import jax
import jax.numpy as jnp
from jax.experimental import pallas as pl
from jax.experimental.pallas import tpu as pltpu

_HALF_LOG_2PI = 0.5 * math.log(2.0 * math.pi)


def _gaussian_policy_kernel(x_ref, eps_ref,
                            w1_ref, b1_ref, w2_ref, b2_ref,
                            wm_ref, bm_ref, ws_ref, bs_ref,
                            sample_ref, logpi_ref, mean_ref,
                            *, log_std_min, log_std_max):
    # Trunk MLP: Linear -> ReLU -> Linear -> ReLU (f32 accumulation on MXU).
    h = jnp.dot(x_ref[...], w1_ref[...],
                preferred_element_type=jnp.float32) + b1_ref[...]
    h = jnp.maximum(h, 0.0)
    h = jnp.dot(h, w2_ref[...],
                preferred_element_type=jnp.float32) + b2_ref[...]
    h = jnp.maximum(h, 0.0)

    # Heads.
    mu = jnp.dot(h, wm_ref[...],
                 preferred_element_type=jnp.float32) + bm_ref[...]
    log_std = jnp.dot(h, ws_ref[...],
                      preferred_element_type=jnp.float32) + bs_ref[...]
    log_std = jnp.clip(log_std, log_std_min, log_std_max)
    std = jnp.exp(log_std)

    # Reparameterized sample: mu + std * eps, eps ~ N(0, 1) supplied by wrapper.
    eps = eps_ref[...]
    sample = mu + std * eps

    # log N(sample; mu, std) with (sample - mu) / std == eps exactly.
    log_prob = -0.5 * eps * eps - log_std - _HALF_LOG_2PI

    sample_ref[...] = sample.astype(sample_ref.dtype)
    logpi_ref[...] = jnp.sum(log_prob, axis=-1,
                             keepdims=True).astype(logpi_ref.dtype)
    mean_ref[...] = mu.astype(mean_ref.dtype)


def _round_up(x, m):
    return ((x + m - 1) // m) * m


def _pad_rows(x, rows):
    if x.shape[0] == rows:
        return x
    pad = rows - x.shape[0]
    return jnp.concatenate(
        [x, jnp.zeros((pad,) + x.shape[1:], dtype=x.dtype)], axis=0)


def gaussian_policy_forward(state, eps, params, log_std_bounds, block_b=2048):
    """Fused GaussianPolicy forward.

    state: (B, input_size) f32; eps: (B, num_actions) f32 standard-normal.
    Returns (sample, log_pi, mean) with shapes (B, A), (B, 1), (B, A).
    """
    w1, b1, w2, b2, wm, bm, ws, bs = params
    B, in_size = state.shape
    h1 = w1.shape[1]
    h2 = w2.shape[1]
    A = wm.shape[1]
    log_std_min = float(log_std_bounds[0])
    log_std_max = float(log_std_bounds[1])

    # Batch tile: whole (sublane-aligned) batch in one step for small B,
    # otherwise block_b rows per grid step.  Padded rows are sliced off.
    if B <= block_b:
        padded_b = max(_round_up(B, 8), 8)
        tb = padded_b
    else:
        tb = block_b
        padded_b = _round_up(B, tb)
    state_p = _pad_rows(state, padded_b)
    eps_p = _pad_rows(eps, padded_b)

    row = lambda i: (i, 0)        # batch-tiled operands
    resident = lambda i: (0, 0)   # weights/biases: same block every grid step

    grid_spec = pltpu.PrefetchScalarGridSpec(
        num_scalar_prefetch=0,
        grid=(padded_b // tb,),
        in_specs=[
            pl.BlockSpec((tb, in_size), row),   # state
            pl.BlockSpec((tb, A), row),         # eps
            pl.BlockSpec(w1.shape, resident),
            pl.BlockSpec(b1.shape, resident),
            pl.BlockSpec(w2.shape, resident),
            pl.BlockSpec(b2.shape, resident),
            pl.BlockSpec(wm.shape, resident),
            pl.BlockSpec(bm.shape, resident),
            pl.BlockSpec(ws.shape, resident),
            pl.BlockSpec(bs.shape, resident),
        ],
        out_specs=[
            pl.BlockSpec((tb, A), row),    # sample
            pl.BlockSpec((tb, 1), row),    # log_pi
            pl.BlockSpec((tb, A), row),    # mean
        ],
    )

    kernel = functools.partial(_gaussian_policy_kernel,
                               log_std_min=log_std_min,
                               log_std_max=log_std_max)

    # Advisory cost hint so XLA schedules neighbours sensibly.
    flops = 2 * padded_b * (in_size * h1 + h1 * h2 + 2 * h2 * A)
    weight_bytes = sum(int(p.size) for p in params) * 4
    bytes_accessed = (padded_b * (in_size + A) * 4            # inputs
                      + padded_b * (2 * A + 1) * 4            # outputs
                      + weight_bytes)
    cost = pl.CostEstimate(flops=flops,
                           transcendentals=padded_b * A,
                           bytes_accessed=bytes_accessed)

    sample, log_pi, mean = pl.pallas_call(
        kernel,
        grid_spec=grid_spec,
        out_shape=(
            jax.ShapeDtypeStruct((padded_b, A), jnp.float32),
            jax.ShapeDtypeStruct((padded_b, 1), jnp.float32),
            jax.ShapeDtypeStruct((padded_b, A), jnp.float32),
        ),
        compiler_params=pltpu.CompilerParams(
            dimension_semantics=("parallel",),
            vmem_limit_bytes=48 * 1024 * 1024,
        ),
        cost_estimate=cost,
    )(state_p, eps_p, w1, b1, w2, b2, wm, bm, ws, bs)

    if padded_b != B:
        sample, log_pi, mean = sample[:B], log_pi[:B], mean[:B]
    return sample, log_pi, mean


def init_params(key, input_size, hidden_sizes, num_actions):
    """Seeded init mimicking nn.Linear default uniform init; (in, out) layout."""
    h1, h2 = hidden_sizes
    shapes = [(input_size, h1), (h1, h2), (h2, num_actions), (h2, num_actions)]
    keys = jax.random.split(key, 2 * len(shapes))
    params = []
    for i, (fan_in, fan_out) in enumerate(shapes):
        bound = 1.0 / math.sqrt(fan_in)
        w = jax.random.uniform(keys[2 * i], (fan_in, fan_out),
                               minval=-bound, maxval=bound, dtype=jnp.float32)
        b = jax.random.uniform(keys[2 * i + 1], (1, fan_out),
                               minval=-bound, maxval=bound, dtype=jnp.float32)
        params.extend([w, b])
    return tuple(params)


def reference_forward(state, eps, params, log_std_bounds):
    """Pure-JAX reference for correctness checking."""
    w1, b1, w2, b2, wm, bm, ws, bs = params
    h = jnp.maximum(state @ w1 + b1, 0.0)
    h = jnp.maximum(h @ w2 + b2, 0.0)
    mu = h @ wm + bm
    log_std = jnp.clip(h @ ws + bs, log_std_bounds[0], log_std_bounds[1])
    std = jnp.exp(log_std)
    sample = mu + std * eps
    log_prob = -0.5 * eps * eps - log_std - _HALF_LOG_2PI
    log_pi = jnp.sum(log_prob, axis=-1, keepdims=True)
    return sample, log_pi, mu


def _check(batch, input_size, hidden_sizes, num_actions, log_std_bounds,
           block_b, seed):
    key = jax.random.PRNGKey(seed)
    k_params, k_state, k_eps = jax.random.split(key, 3)
    params = init_params(k_params, input_size, hidden_sizes, num_actions)
    state = jax.random.normal(k_state, (batch, input_size), dtype=jnp.float32)
    # Reparameterization noise generated in the wrapper (not in-kernel PRNG)
    # so the result is deterministic and checkable against the reference.
    eps = jax.random.normal(k_eps, (batch, num_actions), dtype=jnp.float32)

    sample, log_pi, mean = gaussian_policy_forward(
        state, eps, params, log_std_bounds, block_b=block_b)
    sample, log_pi, mean = jax.block_until_ready((sample, log_pi, mean))

    ref_sample, ref_log_pi, ref_mean = reference_forward(
        state, eps, params, log_std_bounds)

    assert sample.shape == (batch, num_actions)
    assert log_pi.shape == (batch, 1)
    assert mean.shape == (batch, num_actions)
    assert jnp.allclose(sample, ref_sample, atol=1e-5, rtol=1e-5), "sample mismatch"
    assert jnp.allclose(log_pi, ref_log_pi, atol=1e-5, rtol=1e-5), "log_pi mismatch"
    assert jnp.allclose(mean, ref_mean, atol=1e-5, rtol=1e-5), "mean mismatch"


if __name__ == "__main__":
    # Small shapes consistent with a GaussianPolicy MLP actor.
    input_size = 16
    hidden_sizes = (32, 32)
    num_actions = 4
    log_std_bounds = [-20.0, 2.0]

    # 1) Tiny batch (single grid step, sublane-padded).
    _check(batch=4, input_size=input_size, hidden_sizes=hidden_sizes,
           num_actions=num_actions, log_std_bounds=log_std_bounds,
           block_b=2048, seed=0)

    # 2) Non-multiple-of-8 batch (exercises row padding / slice-off).
    _check(batch=37, input_size=input_size, hidden_sizes=hidden_sizes,
           num_actions=num_actions, log_std_bounds=log_std_bounds,
           block_b=2048, seed=1)

    # 3) Batch larger than the tile (exercises the multi-step pipelined grid).
    _check(batch=300, input_size=input_size, hidden_sizes=hidden_sizes,
           num_actions=num_actions, log_std_bounds=log_std_bounds,
           block_b=128, seed=2)

    print("KERNEL_OK")
</pallas_src>

<mosaic_0001>
module attributes {stable_mosaic.version = 11 : i64} {
  func.func @_gaussian_policy_kernel(%arg0: i32, %arg1: memref<8x16xf32, #tpu.memory_space<vmem>>, %arg2: memref<8x4xf32, #tpu.memory_space<vmem>>, %arg3: memref<16x32xf32, #tpu.memory_space<vmem>>, %arg4: memref<1x32xf32, #tpu.memory_space<vmem>>, %arg5: memref<32x32xf32, #tpu.memory_space<vmem>>, %arg6: memref<1x32xf32, #tpu.memory_space<vmem>>, %arg7: memref<32x4xf32, #tpu.memory_space<vmem>>, %arg8: memref<1x4xf32, #tpu.memory_space<vmem>>, %arg9: memref<32x4xf32, #tpu.memory_space<vmem>>, %arg10: memref<1x4xf32, #tpu.memory_space<vmem>>, %arg11: memref<8x4xf32, #tpu.memory_space<vmem>>, %arg12: memref<8x1xf32, #tpu.memory_space<vmem>>, %arg13: memref<8x4xf32, #tpu.memory_space<vmem>>) attributes {dimension_semantics = [#tpu.dimension_semantics<parallel>], iteration_bounds = array<i64: 1>, scalar_prefetch = 0 : i64, scratch_operands = 0 : i64, tpu.core_type = #tpu.core_type<tc>, window_params = [{transform_indices = @transform_0, window_bounds = array<i64: 8, 16>}, {transform_indices = @transform_1, window_bounds = array<i64: 8, 4>}, {pipeline_mode = #tpu.pipeline_mode<synchronous>, transform_indices = @transform_2, window_bounds = array<i64: 16, 32>}, {pipeline_mode = #tpu.pipeline_mode<synchronous>, transform_indices = @transform_3, window_bounds = array<i64: 1, 32>}, {pipeline_mode = #tpu.pipeline_mode<synchronous>, transform_indices = @transform_4, window_bounds = array<i64: 32, 32>}, {pipeline_mode = #tpu.pipeline_mode<synchronous>, transform_indices = @transform_5, window_bounds = array<i64: 1, 32>}, {pipeline_mode = #tpu.pipeline_mode<synchronous>, transform_indices = @transform_6, window_bounds = array<i64: 32, 4>}, {pipeline_mode = #tpu.pipeline_mode<synchronous>, transform_indices = @transform_7, window_bounds = array<i64: 1, 4>}, {pipeline_mode = #tpu.pipeline_mode<synchronous>, transform_indices = @transform_8, window_bounds = array<i64: 32, 4>}, {pipeline_mode = #tpu.pipeline_mode<synchronous>, transform_indices = @transform_9, window_bounds = array<i64: 1, 4>}, {transform_indices = @transform_10, window_bounds = array<i64: 8, 4>}, {transform_indices = @transform_11, window_bounds = array<i64: 8, 1>}, {transform_indices = @transform_12, window_bounds = array<i64: 8, 4>}]} {
    %c0 = arith.constant 0 : index
    %c0_0 = arith.constant 0 : index
    %0 = vector.load %arg1[%c0, %c0_0] : memref<8x16xf32, #tpu.memory_space<vmem>>, vector<8x16xf32>
    %c0_1 = arith.constant 0 : index
    %c0_2 = arith.constant 0 : index
    %1 = vector.load %arg3[%c0_1, %c0_2] : memref<16x32xf32, #tpu.memory_space<vmem>>, vector<16x32xf32>
    %cst = arith.constant dense<0.000000e+00> : vector<8x32xf32>
    %2 = tpu.matmul %0, %1, %cst {dimension_numbers = #tpu.dot_dimension_numbers<[1], [0], [0], [1], [0, 0, 1, 1], [], []>} : vector<8x16xf32>, vector<16x32xf32>, vector<8x32xf32> -> vector<8x32xf32>
    %c0_3 = arith.constant 0 : index
    %c0_4 = arith.constant 0 : index
    %3 = vector.load %arg4[%c0_3, %c0_4] : memref<1x32xf32, #tpu.memory_space<vmem>>, vector<1x32xf32>
    %4 = vector.broadcast %3 : vector<1x32xf32> to vector<8x32xf32>
    %5 = arith.addf %2, %4 : vector<8x32xf32>
    %cst_5 = arith.constant 0.000000e+00 : f32
    %6 = vector.broadcast %cst_5 : f32 to vector<8x32xf32>
    %7 = arith.maximumf %5, %6 : vector<8x32xf32>
    %c0_6 = arith.constant 0 : index
    %c0_7 = arith.constant 0 : index
    %8 = vector.load %arg5[%c0_6, %c0_7] : memref<32x32xf32, #tpu.memory_space<vmem>>, vector<32x32xf32>
    %cst_8 = arith.constant dense<0.000000e+00> : vector<8x32xf32>
    %9 = tpu.matmul %7, %8, %cst_8 {dimension_numbers = #tpu.dot_dimension_numbers<[1], [0], [0], [1], [0, 0, 1, 1], [], []>} : vector<8x32xf32>, vector<32x32xf32>, vector<8x32xf32> -> vector<8x32xf32>
    %c0_9 = arith.constant 0 : index
    %c0_10 = arith.constant 0 : index
    %10 = vector.load %arg6[%c0_9, %c0_10] : memref<1x32xf32, #tpu.memory_space<vmem>>, vector<1x32xf32>
    %11 = vector.broadcast %10 : vector<1x32xf32> to vector<8x32xf32>
    %12 = arith.addf %9, %11 : vector<8x32xf32>
    %cst_11 = arith.constant 0.000000e+00 : f32
    %13 = vector.broadcast %cst_11 : f32 to vector<8x32xf32>
    %14 = arith.maximumf %12, %13 : vector<8x32xf32>
    %c0_12 = arith.constant 0 : index
    %c0_13 = arith.constant 0 : index
    %15 = vector.load %arg7[%c0_12, %c0_13] : memref<32x4xf32, #tpu.memory_space<vmem>>, vector<32x4xf32>
    %cst_14 = arith.constant dense<0.000000e+00> : vector<8x4xf32>
    %16 = tpu.matmul %14, %15, %cst_14 {dimension_numbers = #tpu.dot_dimension_numbers<[1], [0], [0], [1], [0, 0, 1, 1], [], []>} : vector<8x32xf32>, vector<32x4xf32>, vector<8x4xf32> -> vector<8x4xf32>
    %c0_15 = arith.constant 0 : index
    %c0_16 = arith.constant 0 : index
    %17 = vector.load %arg8[%c0_15, %c0_16] : memref<1x4xf32, #tpu.memory_space<vmem>>, vector<1x4xf32>
    %18 = vector.broadcast %17 : vector<1x4xf32> to vector<8x4xf32>
    %19 = arith.addf %16, %18 : vector<8x4xf32>
    %c0_17 = arith.constant 0 : index
    %c0_18 = arith.constant 0 : index
    %20 = vector.load %arg9[%c0_17, %c0_18] : memref<32x4xf32, #tpu.memory_space<vmem>>, vector<32x4xf32>
    %cst_19 = arith.constant dense<0.000000e+00> : vector<8x4xf32>
    %21 = tpu.matmul %14, %20, %cst_19 {dimension_numbers = #tpu.dot_dimension_numbers<[1], [0], [0], [1], [0, 0, 1, 1], [], []>} : vector<8x32xf32>, vector<32x4xf32>, vector<8x4xf32> -> vector<8x4xf32>
    %c0_20 = arith.constant 0 : index
    %c0_21 = arith.constant 0 : index
    %22 = vector.load %arg10[%c0_20, %c0_21] : memref<1x4xf32, #tpu.memory_space<vmem>>, vector<1x4xf32>
    %23 = vector.broadcast %22 : vector<1x4xf32> to vector<8x4xf32>
    %24 = arith.addf %21, %23 : vector<8x4xf32>
    %cst_22 = arith.constant -2.000000e+01 : f32
    %cst_23 = arith.constant 2.000000e+00 : f32
    %25 = vector.broadcast %cst_22 : f32 to vector<8x4xf32>
    %26 = arith.maximumf %25, %24 : vector<8x4xf32>
    %27 = vector.broadcast %cst_23 : f32 to vector<8x4xf32>
    %28 = arith.minimumf %27, %26 : vector<8x4xf32>
    %29 = math.exp %28 : vector<8x4xf32>
    %c0_24 = arith.constant 0 : index
    %c0_25 = arith.constant 0 : index
    %30 = vector.load %arg2[%c0_24, %c0_25] : memref<8x4xf32, #tpu.memory_space<vmem>>, vector<8x4xf32>
    %31 = arith.mulf %29, %30 : vector<8x4xf32>
    %32 = arith.addf %19, %31 : vector<8x4xf32>
    %cst_26 = arith.constant -5.000000e-01 : f32
    %33 = vector.broadcast %cst_26 : f32 to vector<8x4xf32>
    %34 = arith.mulf %33, %30 : vector<8x4xf32>
    %35 = arith.mulf %34, %30 : vector<8x4xf32>
    %36 = arith.subf %35, %28 : vector<8x4xf32>
    %cst_27 = arith.constant 0.918938517 : f32
    %37 = vector.broadcast %cst_27 : f32 to vector<8x4xf32>
    %38 = arith.subf %36, %37 : vector<8x4xf32>
    %c0_28 = arith.constant 0 : index
    %c0_29 = arith.constant 0 : index
    %39 = vector.load %arg11[%c0_28, %c0_29] : memref<8x4xf32, #tpu.memory_space<vmem>>, vector<8x4xf32>
    tpu.vector_store %arg11[%c0_28, %c0_29], %32 {strides = array<i32>} : memref<8x4xf32, #tpu.memory_space<vmem>>, vector<8x4xf32>,
    %cst_30 = arith.constant dense<0.000000e+00> : vector<8xf32>
    %40 = vector.multi_reduction <add>, %38, %cst_30 [1] : vector<8x4xf32> to vector<8xf32>
    %41 = vector.shape_cast %40 : vector<8xf32> to vector<8x1xf32>
    %c0_31 = arith.constant 0 : index
    %c0_32 = arith.constant 0 : index
    %42 = vector.load %arg12[%c0_31, %c0_32] : memref<8x1xf32, #tpu.memory_space<vmem>>, vector<8x1xf32>
    tpu.vector_store %arg12[%c0_31, %c0_32], %41 {strides = array<i32>} : memref<8x1xf32, #tpu.memory_space<vmem>>, vector<8x1xf32>,
    %c0_33 = arith.constant 0 : index
    %c0_34 = arith.constant 0 : index
    %43 = vector.load %arg13[%c0_33, %c0_34] : memref<8x4xf32, #tpu.memory_space<vmem>>, vector<8x4xf32>
    tpu.vector_store %arg13[%c0_33, %c0_34], %19 {strides = array<i32>} : memref<8x4xf32, #tpu.memory_space<vmem>>, vector<8x4xf32>,
    return
  }
  func.func @transform_0(%arg0: i32) -> (i32, i32) {
    %c0_i32 = arith.constant 0 : i32
    %c0_i32_0 = arith.constant 0 : i32
    return %arg0, %c0_i32 : i32, i32
  }
  func.func @transform_1(%arg0: i32) -> (i32, i32) {
    %c0_i32 = arith.constant 0 : i32
    %c0_i32_0 = arith.constant 0 : i32
    return %arg0, %c0_i32 : i32, i32
  }
  func.func @transform_2(%arg0: i32) -> (i32, i32) {
    %c0_i32 = arith.constant 0 : i32
    %c0_i32_0 = arith.constant 0 : i32
    %c0_i32_1 = arith.constant 0 : i32
    return %c0_i32, %c0_i32_0 : i32, i32
  }
  func.func @transform_3(%arg0: i32) -> (i32, i32) {
    %c0_i32 = arith.constant 0 : i32
    %c0_i32_0 = arith.constant 0 : i32
    %c0_i32_1 = arith.constant 0 : i32
    return %c0_i32, %c0_i32_0 : i32, i32
  }
  func.func @transform_4(%arg0: i32) -> (i32, i32) {
    %c0_i32 = arith.constant 0 : i32
    %c0_i32_0 = arith.constant 0 : i32
    %c0_i32_1 = arith.constant 0 : i32
    return %c0_i32, %c0_i32_0 : i32, i32
  }
  func.func @transform_5(%arg0: i32) -> (i32, i32) {
    %c0_i32 = arith.constant 0 : i32
    %c0_i32_0 = arith.constant 0 : i32
    %c0_i32_1 = arith.constant 0 : i32
    return %c0_i32, %c0_i32_0 : i32, i32
  }
  func.func @transform_6(%arg0: i32) -> (i32, i32) {
    %c0_i32 = arith.constant 0 : i32
    %c0_i32_0 = arith.constant 0 : i32
    %c0_i32_1 = arith.constant 0 : i32
    return %c0_i32, %c0_i32_0 : i32, i32
  }
  func.func @transform_7(%arg0: i32) -> (i32, i32) {
    %c0_i32 = arith.constant 0 : i32
    %c0_i32_0 = arith.constant 0 : i32
    %c0_i32_1 = arith.constant 0 : i32
    return %c0_i32, %c0_i32_0 : i32, i32
  }
  func.func @transform_8(%arg0: i32) -> (i32, i32) {
    %c0_i32 = arith.constant 0 : i32
    %c0_i32_0 = arith.constant 0 : i32
    %c0_i32_1 = arith.constant 0 : i32
    return %c0_i32, %c0_i32_0 : i32, i32
  }
  func.func @transform_9(%arg0: i32) -> (i32, i32) {
    %c0_i32 = arith.constant 0 : i32
    %c0_i32_0 = arith.constant 0 : i32
    %c0_i32_1 = arith.constant 0 : i32
    return %c0_i32, %c0_i32_0 : i32, i32
  }
  func.func @transform_10(%arg0: i32) -> (i32, i32) {
    %c0_i32 = arith.constant 0 : i32
    %c0_i32_0 = arith.constant 0 : i32
    return %arg0, %c0_i32 : i32, i32
  }
  func.func @transform_11(%arg0: i32) -> (i32, i32) {
    %c0_i32 = arith.constant 0 : i32
    %c0_i32_0 = arith.constant 0 : i32
    return %arg0, %c0_i32 : i32, i32
  }
  func.func @transform_12(%arg0: i32) -> (i32, i32) {
    %c0_i32 = arith.constant 0 : i32
    %c0_i32_0 = arith.constant 0 : i32
    return %arg0, %c0_i32 : i32, i32
  }
}

</mosaic_0001>

<llo_original>
// kernel: tpu_custom_call.1
$region0: #{tpu_custom_call.1}
  #allocation0 [shape = 'u32[]', space=smem, size = 0x4, offset = 0x4, fixed_abs, tag = 'smem constant byte address 0x4 - core index']
  #allocation1 [shape = 'u32[144,128]{1,0:T(1,128)}', space=vmem, size = 0x12000, scoped, tag = 'internal scratch']
  %s0 = inlined_call_operand.vmem [shape: f32[8,16], index: 0, kind: input, shape index: {}]
  %s1 = inlined_call_operand.vmem [shape: f32[8,4], index: 1, kind: input, shape index: {}]
  %s2 = inlined_call_operand.vmem [shape: f32[16,32], index: 2, kind: input, shape index: {}]
  %s3 = inlined_call_operand.vmem [shape: f32[1,32], index: 3, kind: input, shape index: {}]
  %s4 = inlined_call_operand.vmem [shape: f32[32,32], index: 4, kind: input, shape index: {}]
  %s5 = inlined_call_operand.vmem [shape: f32[1,32], index: 5, kind: input, shape index: {}]
  %s6 = inlined_call_operand.vmem [shape: f32[32,4], index: 6, kind: input, shape index: {}]
  %s7 = inlined_call_operand.vmem [shape: f32[1,4], index: 7, kind: input, shape index: {}]
  %s8 = inlined_call_operand.vmem [shape: f32[32,4], index: 8, kind: input, shape index: {}]
  %s9 = inlined_call_operand.vmem [shape: f32[1,4], index: 9, kind: input, shape index: {}]
  %s10 = inlined_call_operand.vmem [shape: f32[8,4], index: 10, kind: output, shape index: {0}]
  %s11 = inlined_call_operand.vmem [shape: f32[8,1], index: 11, kind: output, shape index: {1}]
  %s12 = inlined_call_operand.vmem [shape: f32[8,4], index: 12, kind: output, shape index: {2}]
  %13 = xla_tuple %s10, %s11, %s12
  %s14 = sld [smem:[#allocation0]]
  $region66: #{tpu_custom_call.1} parent=0
    _
  %s16 = ssub.s32 1, %s14
  %s17 = scalar_select 0, %s16, %s14
  // Predicated region
  $region2: #{tpu_custom_call.1} parent=0 // pred_check
    _
  $region3: #{tpu_custom_call.1} parent=0 // pred_check_branch
    %19 = sbr.rel (0) target = $region5
  $region4: #{tpu_custom_call.1} parent=0 // pred_region
    _
  $region5: #{tpu_custom_call.1} parent=0 // pred_fallthru
    _
  // Predicated region
  $region6: #{tpu_custom_call.1} parent=0 // pred_check
    _
  $region7: #{tpu_custom_call.1} parent=0 // pred_check_branch
    %21 = sbr.rel (0) target = $region9
  $region8: #{tpu_custom_call.1} parent=0 // pred_region
    _
  $region9: #{tpu_custom_call.1} parent=0 // pred_fallthru
    _
  // Predicated region
  $region10: #{tpu_custom_call.1} parent=0 // pred_check
    _
  $region11: #{tpu_custom_call.1} parent=0 // pred_check_branch
    %23 = sbr.rel (0) target = $region13
  $region12: #{tpu_custom_call.1} parent=0 // pred_region
    _
  $region13: #{tpu_custom_call.1} parent=0 // pred_fallthru
    _
  // Predicated region
  $region14: #{tpu_custom_call.1} parent=0 // pred_check
    _
  $region15: #{tpu_custom_call.1} parent=0 // pred_check_branch
    %25 = sbr.rel (0) target = $region17
  $region16: #{tpu_custom_call.1} parent=0 // pred_region
    _
  $region17: #{tpu_custom_call.1} parent=0 // pred_fallthru
    _
  // Predicated region
  $region18: #{tpu_custom_call.1} parent=0 // pred_check
    _
  $region19: #{tpu_custom_call.1} parent=0 // pred_check_branch
    %27 = sbr.rel (0) target = $region21
  $region20: #{tpu_custom_call.1} parent=0 // pred_region
    _
  $region21: #{tpu_custom_call.1} parent=0 // pred_fallthru
    _
  // Predicated region
  $region22: #{tpu_custom_call.1} parent=0 // pred_check
    _
  $region23: #{tpu_custom_call.1} parent=0 // pred_check_branch
    %29 = sbr.rel (0) target = $region25
  $region24: #{tpu_custom_call.1} parent=0 // pred_region
    _
  $region25: #{tpu_custom_call.1} parent=0 // pred_fallthru
    _
  // Predicated region
  $region26: #{tpu_custom_call.1} parent=0 // pred_check
    _
  $region27: #{tpu_custom_call.1} parent=0 // pred_check_branch
    %31 = sbr.rel (0) target = $region29
  $region28: #{tpu_custom_call.1} parent=0 // pred_region
    _
  $region29: #{tpu_custom_call.1} parent=0 // pred_fallthru
    _
  // Predicated region
  $region30: #{tpu_custom_call.1} parent=0 // pred_check
    _
  $region31: #{tpu_custom_call.1} parent=0 // pred_check_branch
    %33 = sbr.rel (0) target = $region33
  $region32: #{tpu_custom_call.1} parent=0 // pred_region
    _
  $region33: #{tpu_custom_call.1} parent=0 // pred_fallthru
    _
  // Predicated region
  $region34: #{tpu_custom_call.1} parent=0 // pred_check
    _
  $region35: #{tpu_custom_call.1} parent=0 // pred_check_branch
    %35 = sbr.rel (0) target = $region37
  $region36: #{tpu_custom_call.1} parent=0 // pred_region
    _
  $region37: #{tpu_custom_call.1} parent=0 // pred_fallthru
    _
  // Predicated region
  $region38: #{tpu_custom_call.1} parent=0 // pred_check
    _
  $region39: #{tpu_custom_call.1} parent=0 // pred_check_branch
    %37 = sbr.rel (0) target = $region41
  $region40: #{tpu_custom_call.1} parent=0 // pred_region
    _
  $region41: #{tpu_custom_call.1} parent=0 // pred_fallthru
    _
  %v38 = vld [vmem:[%s0] sm:$0xff]
  %v39 = vld [vmem:[%s2] sm:$0xff]
  %v40 = vld [vmem:[%s2 + $0x8] sm:$0xff]
  %v41 = vld [vmem:[%s3] sm:$0x1]
  %v43 = vlaneseq
  %v44 = vshrl.u32 %v43, 7
  %v45 = vsub.s32 0, %v44
  %v46 = vrot.slane %v41, %v45
  %vm48 = vcmask 130048
  %v50 = vsel %vm48, %v38, 0
  %52 = vmatprep.subr.mxu0 0.0
  %53 = vmatpush1.msra.mxu0 0.0
  %54 = vmatprep.subr.mxu0 0.0
  %55 = vmatpush1.msra.mxu0 0.0
  %56 = vmatprep.subr.mxu0 0.0
  %57 = vmatpush1.msra.mxu0 0.0
  %58 = vmatprep.subr.mxu0 0.0
  %59 = vmatpush1.msra.mxu0 0.0
  %60 = vmatprep.subr.mxu0 0.0
  %61 = vmatpush1.msra.mxu0 0.0
  %62 = vmatprep.subr.mxu0 0.0
  %63 = vmatpush1.msra.mxu0 0.0
  %64 = vmatprep.subr.mxu0 0.0
  %65 = vmatpush1.msra.mxu0 0.0
  %66 = vmatprep.subr.mxu0 0.0
  %67 = vmatpush1.msra.mxu0 0.0
  %68 = vmatprep.subr.mxu0 0.0
  %69 = vmatpush1.msra.mxu0 0.0
  %70 = vmatprep.subr.mxu0 0.0
  %71 = vmatpush1.msra.mxu0 0.0
  %72 = vmatprep.subr.mxu0 0.0
  %73 = vmatpush1.msra.mxu0 0.0
  %74 = vmatprep.subr.mxu0 0.0
  %75 = vmatpush1.msra.mxu0 0.0
  %76 = vmatprep.subr.mxu0 0.0
  %77 = vmatpush1.msra.mxu0 0.0
  %78 = vmatprep.subr.mxu0 0.0
  %79 = vmatpush1.msra.mxu0 0.0
  %80 = vmatprep.subr.mxu0 0.0
  %81 = vmatpush1.msra.mxu0 %v40
  %82 = vmatprep.subr.mxu0 0.0
  %83 = vmatpush1.msra.mxu0 %v39
  %84 = vmatprep.subr.mxu0 0.0
  %85 = vmatpush2.msra.mxu0 0.0
  %86 = vmatprep.subr.mxu0 0.0
  %87 = vmatpush2.msra.mxu0 0.0
  %88 = vmatprep.subr.mxu0 0.0
  %89 = vmatpush2.msra.mxu0 0.0
  %90 = vmatprep.subr.mxu0 0.0
  %91 = vmatpush2.msra.mxu0 0.0
  %92 = vmatprep.subr.mxu0 0.0
  %93 = vmatpush2.msra.mxu0 0.0
  %94 = vmatprep.subr.mxu0 0.0
  %95 = vmatpush2.msra.mxu0 0.0
  %96 = vmatprep.subr.mxu0 0.0
  %97 = vmatpush2.msra.mxu0 0.0
  %98 = vmatprep.subr.mxu0 0.0
  %99 = vmatpush2.msra.mxu0 0.0
  %100 = vmatprep.subr.mxu0 0.0
  %101 = vmatpush2.msra.mxu0 0.0
  %102 = vmatprep.subr.mxu0 0.0
  %103 = vmatpush2.msra.mxu0 0.0
  %104 = vmatprep.subr.mxu0 0.0
  %105 = vmatpush2.msra.mxu0 0.0
  %106 = vmatprep.subr.mxu0 0.0
  %107 = vmatpush2.msra.mxu0 0.0
  %108 = vmatprep.subr.mxu0 0.0
  %109 = vmatpush2.msra.mxu0 0.0
  %110 = vmatprep.subr.mxu0 0.0
  %111 = vmatpush2.msra.mxu0 0.0
  %112 = vmatprep.subr.mxu0 0.0
  %113 = vmatpush2.msra.mxu0 0.0
  %114 = vmatprep.subr.mxu0 0.0
  %115 = vmatpush2.msra.mxu0 0.0
  %116 = vmatprep.mubr.f32.mxu0 0.0
  %117 = vmatmul.mubr.f32.gmra.mxu0 %v50
  %v118 = vpop.f32.mrf.mxu0
  %v119 = vadd.f32 %v46, %v118
  %v120 = vpop.f32.mrf.mxu0
  %121 = vdwg.mxu0
  %v122 = vmax.f32 %v119, 0.0
  %v123 = vld [vmem:[%s4] sm:$0xff]
  %v124 = vld [vmem:[%s4 + $0x8] sm:$0xff]
  %v125 = vld [vmem:[%s4 + $0x10] sm:$0xff]
  %v126 = vld [vmem:[%s4 + $0x18] sm:$0xff]
  %v127 = vld [vmem:[%s5] sm:$0x1]
  %v129 = vlaneseq
  %v130 = vshrl.u32 %v129, 7
  %v131 = vsub.s32 0, %v130
  %v132 = vrot.slane %v127, %v131
  %vm134 = vcmask 261120
  %v136 = vsel %vm134, %v122, 0
  %138 = vmatprep.subr.mxu0 0.0
  %139 = vmatpush1.msra.mxu0 0.0
  %140 = vmatprep.subr.mxu0 0.0
  %141 = vmatpush1.msra.mxu0 0.0
  %142 = vmatprep.subr.mxu0 0.0
  %143 = vmatpush1.msra.mxu0 0.0
  %144 = vmatprep.subr.mxu0 0.0
  %145 = vmatpush1.msra.mxu0 0.0
  %146 = vmatprep.subr.mxu0 0.0
  %147 = vmatpush1.msra.mxu0 0.0
  %148 = vmatprep.subr.mxu0 0.0
  %149 = vmatpush1.msra.mxu0 0.0
  %150 = vmatprep.subr.mxu0 0.0
  %151 = vmatpush1.msra.mxu0 0.0
  %152 = vmatprep.subr.mxu0 0.0
  %153 = vmatpush1.msra.mxu0 0.0
  %154 = vmatprep.subr.mxu0 0.0
  %155 = vmatpush1.msra.mxu0 0.0
  %156 = vmatprep.subr.mxu0 0.0
  %157 = vmatpush1.msra.mxu0 0.0
  %158 = vmatprep.subr.mxu0 0.0
  %159 = vmatpush1.msra.mxu0 0.0
  %160 = vmatprep.subr.mxu0 0.0
  %161 = vmatpush1.msra.mxu0 0.0
  %162 = vmatprep.subr.mxu0 0.0
  %163 = vmatpush1.msra.mxu0 %v126
  %164 = vmatprep.subr.mxu0 0.0
  %165 = vmatpush1.msra.mxu0 %v125
  %166 = vmatprep.subr.mxu0 0.0
  %167 = vmatpush1.msra.mxu0 %v124
  %168 = vmatprep.subr.mxu0 0.0
  %169 = vmatpush1.msra.mxu0 %v123
  %170 = vmatprep.subr.mxu0 0.0
  %171 = vmatpush2.msra.mxu0 0.0
  %172 = vmatprep.subr.mxu0 0.0
  %173 = vmatpush2.msra.mxu0 0.0
  %174 = vmatprep.subr.mxu0 0.0
  %175 = vmatpush2.msra.mxu0 0.0
  %176 = vmatprep.subr.mxu0 0.0
  %177 = vmatpush2.msra.mxu0 0.0
  %178 = vmatprep.subr.mxu0 0.0
  %179 = vmatpush2.msra.mxu0 0.0
  %180 = vmatprep.subr.mxu0 0.0
  %181 = vmatpush2.msra.mxu0 0.0
  %182 = vmatprep.subr.mxu0 0.0
  %183 = vmatpush2.msra.mxu0 0.0
  %184 = vmatprep.subr.mxu0 0.0
  %185 = vmatpush2.msra.mxu0 0.0
  %186 = vmatprep.subr.mxu0 0.0
  %187 = vmatpush2.msra.mxu0 0.0
  %188 = vmatprep.subr.mxu0 0.0
  %189 = vmatpush2.msra.mxu0 0.0
  %190 = vmatprep.subr.mxu0 0.0
  %191 = vmatpush2.msra.mxu0 0.0
  %192 = vmatprep.subr.mxu0 0.0
  %193 = vmatpush2.msra.mxu0 0.0
  %194 = vmatprep.subr.mxu0 0.0
  %195 = vmatpush2.msra.mxu0 0.0
  %196 = vmatprep.subr.mxu0 0.0
  %197 = vmatpush2.msra.mxu0 0.0
  %198 = vmatprep.subr.mxu0 0.0
  %199 = vmatpush2.msra.mxu0 0.0
  %200 = vmatprep.subr.mxu0 0.0
  %201 = vmatpush2.msra.mxu0 0.0
  %202 = vmatprep.mubr.f32.mxu0 0.0
  %203 = vmatmul.mubr.f32.gmra.mxu0 %v136
  %v204 = vpop.f32.mrf.mxu0
  %v205 = vadd.f32 %v132, %v204
  %v206 = vpop.f32.mrf.mxu0
  %207 = vdwg.mxu0
  %v208 = vmax.f32 %v205, 0.0
  %v209 = vld [vmem:[%s6] sm:$0xff]
  %v210 = vld [vmem:[%s6 + $0x8] sm:$0xff]
  %v211 = vld [vmem:[%s6 + $0x10] sm:$0xff]
  %v212 = vld [vmem:[%s6 + $0x18] sm:$0xff]
  %v213 = vld [vmem:[%s7] sm:$0x1]
  %v215 = vlaneseq
  %v216 = vshrl.u32 %v215, 7
  %v217 = vsub.s32 0, %v216
  %v218 = vrot.slane %v213, %v217
  %v221 = vsel %vm134, %v208, 0
  %223 = vmatprep.subr.mxu0 0.0
  %224 = vmatpush1.msra.mxu0 0.0
  %225 = vmatprep.subr.mxu0 0.0
  %226 = vmatpush1.msra.mxu0 0.0
  %227 = vmatprep.subr.mxu0 0.0
  %228 = vmatpush1.msra.mxu0 0.0
  %229 = vmatprep.subr.mxu0 0.0
  %230 = vmatpush1.msra.mxu0 0.0
  %231 = vmatprep.subr.mxu0 0.0
  %232 = vmatpush1.msra.mxu0 0.0
  %233 = vmatprep.subr.mxu0 0.0
  %234 = vmatpush1.msra.mxu0 0.0
  %235 = vmatprep.subr.mxu0 0.0
  %236 = vmatpush1.msra.mxu0 0.0
  %237 = vmatprep.subr.mxu0 0.0
  %238 = vmatpush1.msra.mxu0 0.0
  %239 = vmatprep.subr.mxu0 0.0
  %240 = vmatpush1.msra.mxu0 0.0
  %241 = vmatprep.subr.mxu0 0.0
  %242 = vmatpush1.msra.mxu0 0.0
  %243 = vmatprep.subr.mxu0 0.0
  %244 = vmatpush1.msra.mxu0 0.0
  %245 = vmatprep.subr.mxu0 0.0
  %246 = vmatpush1.msra.mxu0 0.0
  %247 = vmatprep.subr.mxu0 0.0
  %248 = vmatpush1.msra.mxu0 %v212
  %249 = vmatprep.subr.mxu0 0.0
  %250 = vmatpush1.msra.mxu0 %v211
  %251 = vmatprep.subr.mxu0 0.0
  %252 = vmatpush1.msra.mxu0 %v210
  %253 = vmatprep.subr.mxu0 0.0
  %254 = vmatpush1.msra.mxu0 %v209
  %255 = vmatprep.subr.mxu0 0.0
  %256 = vmatpush2.msra.mxu0 0.0
  %257 = vmatprep.subr.mxu0 0.0
  %258 = vmatpush2.msra.mxu0 0.0
  %259 = vmatprep.subr.mxu0 0.0
  %260 = vmatpush2.msra.mxu0 0.0
  %261 = vmatprep.subr.mxu0 0.0
  %262 = vmatpush2.msra.mxu0 0.0
  %263 = vmatprep.subr.mxu0 0.0
  %264 = vmatpush2.msra.mxu0 0.0
  %265 = vmatprep.subr.mxu0 0.0
  %266 = vmatpush2.msra.mxu0 0.0
  %267 = vmatprep.subr.mxu0 0.0
  %268 = vmatpush2.msra.mxu0 0.0
  %269 = vmatprep.subr.mxu0 0.0
  %270 = vmatpush2.msra.mxu0 0.0
  %271 = vmatprep.subr.mxu0 0.0
  %272 = vmatpush2.msra.mxu0 0.0
  %273 = vmatprep.subr.mxu0 0.0
  %274 = vmatpush2.msra.mxu0 0.0
  %275 = vmatprep.subr.mxu0 0.0
  %276 = vmatpush2.msra.mxu0 0.0
  %277 = vmatprep.subr.mxu0 0.0
  %278 = vmatpush2.msra.mxu0 0.0
  %279 = vmatprep.subr.mxu0 0.0
  %280 = vmatpush2.msra.mxu0 0.0
  %281 = vmatprep.subr.mxu0 0.0
  %282 = vmatpush2.msra.mxu0 0.0
  %283 = vmatprep.subr.mxu0 0.0
  %284 = vmatpush2.msra.mxu0 0.0
  %285 = vmatprep.subr.mxu0 0.0
  %286 = vmatpush2.msra.mxu0 0.0
  %287 = vmatprep.mubr.f32.mxu0 0.0
  %288 = vmatmul.mubr.f32.gmra.mxu0 %v221
  %v289 = vpop.f32.mrf.mxu0
  %v290 = vadd.f32 %v218, %v289
  %v291 = vpop.f32.mrf.mxu0
  %292 = vdwg.mxu0
  %v293 = vld [vmem:[%s8] sm:$0xff]
  %v294 = vld [vmem:[%s8 + $0x8] sm:$0xff]
  %v295 = vld [vmem:[%s8 + $0x10] sm:$0xff]
  %v296 = vld [vmem:[%s8 + $0x18] sm:$0xff]
  %v297 = vld [vmem:[%s9] sm:$0x1]
  %v299 = vlaneseq
  %v300 = vshrl.u32 %v299, 7
  %v301 = vsub.s32 0, %v300
  %v302 = vrot.slane %v297, %v301
  %304 = vmatprep.subr.mxu0 0.0
  %305 = vmatpush1.msra.mxu0 0.0
  %306 = vmatprep.subr.mxu0 0.0
  %307 = vmatpush1.msra.mxu0 0.0
  %308 = vmatprep.subr.mxu0 0.0
  %309 = vmatpush1.msra.mxu0 0.0
  %310 = vmatprep.subr.mxu0 0.0
  %311 = vmatpush1.msra.mxu0 0.0
  %312 = vmatprep.subr.mxu0 0.0
  %313 = vmatpush1.msra.mxu0 0.0
  %314 = vmatprep.subr.mxu0 0.0
  %315 = vmatpush1.msra.mxu0 0.0
  %316 = vmatprep.subr.mxu0 0.0
  %317 = vmatpush1.msra.mxu0 0.0
  %318 = vmatprep.subr.mxu0 0.0
  %319 = vmatpush1.msra.mxu0 0.0
  %320 = vmatprep.subr.mxu0 0.0
  %321 = vmatpush1.msra.mxu0 0.0
  %322 = vmatprep.subr.mxu0 0.0
  %323 = vmatpush1.msra.mxu0 0.0
  %324 = vmatprep.subr.mxu0 0.0
  %325 = vmatpush1.msra.mxu0 0.0
  %326 = vmatprep.subr.mxu0 0.0
  %327 = vmatpush1.msra.mxu0 0.0
  %328 = vmatprep.subr.mxu0 0.0
  %329 = vmatpush1.msra.mxu0 %v296
  %330 = vmatprep.subr.mxu0 0.0
  %331 = vmatpush1.msra.mxu0 %v295
  %332 = vmatprep.subr.mxu0 0.0
  %333 = vmatpush1.msra.mxu0 %v294
  %334 = vmatprep.subr.mxu0 0.0
  %335 = vmatpush1.msra.mxu0 %v293
  %336 = vmatprep.subr.mxu0 0.0
  %337 = vmatpush2.msra.mxu0 0.0
  %338 = vmatprep.subr.mxu0 0.0
  %339 = vmatpush2.msra.mxu0 0.0
  %340 = vmatprep.subr.mxu0 0.0
  %341 = vmatpush2.msra.mxu0 0.0
  %342 = vmatprep.subr.mxu0 0.0
  %343 = vmatpush2.msra.mxu0 0.0
  %344 = vmatprep.subr.mxu0 0.0
  %345 = vmatpush2.msra.mxu0 0.0
  %346 = vmatprep.subr.mxu0 0.0
  %347 = vmatpush2.msra.mxu0 0.0
  %348 = vmatprep.subr.mxu0 0.0
  %349 = vmatpush2.msra.mxu0 0.0
  %350 = vmatprep.subr.mxu0 0.0
  %351 = vmatpush2.msra.mxu0 0.0
  %352 = vmatprep.subr.mxu0 0.0
  %353 = vmatpush2.msra.mxu0 0.0
  %354 = vmatprep.subr.mxu0 0.0
  %355 = vmatpush2.msra.mxu0 0.0
  %356 = vmatprep.subr.mxu0 0.0
  %357 = vmatpush2.msra.mxu0 0.0
  %358 = vmatprep.subr.mxu0 0.0
  %359 = vmatpush2.msra.mxu0 0.0
  %360 = vmatprep.subr.mxu0 0.0
  %361 = vmatpush2.msra.mxu0 0.0
  %362 = vmatprep.subr.mxu0 0.0
  %363 = vmatpush2.msra.mxu0 0.0
  %364 = vmatprep.subr.mxu0 0.0
  %365 = vmatpush2.msra.mxu0 0.0
  %366 = vmatprep.subr.mxu0 0.0
  %367 = vmatpush2.msra.mxu0 0.0
  %368 = vmatprep.mubr.f32.mxu0 0.0
  %369 = vmatmul.mubr.f32.gmra.mxu0 %v221
  %v370 = vpop.f32.mrf.mxu0
  %v371 = vadd.f32 %v302, %v370
  %v372 = vpop.f32.mrf.mxu0
  %373 = vdwg.mxu0
  %v374 = vmax.f32 %v371, -20.0
  %v375 = vmin.f32 %v374, 2.0
  %v376 = vmul.f32 %v375, 1.442695
  %v377 = vpow.pop %v376
  %v378 = vld [vmem:[%s1] sm:$0xff]
  %v379 = vmul.f32 %v377, %v378
  %v380 = vadd.f32 %v290, %v379
  %v381 = vmul.f32 %v378, -0.5
  %v382 = vmul.f32 %v381, %v378
  %v383 = vsub.f32 %v382, %v375
  %v384 = vsub.f32 %v383, 0.9189385
  %vm385 = vcmask 31744
  %386 = vst.msk [vmem:[%s10] sm:$0xff] %vm385, %v380
  %v387 = vsel %vm385, %v384, 0.0
  %388 = vadd.xlane.f32.xlu0 %v387
  %v389 = vpop.xlane.xlu0 %388
  %vm390 = vcmask 7168
  %391 = vst.msk [vmem:[%s11] sm:$0xff] %vm390, %v389
  %392 = vst.msk [vmem:[%s12] sm:$0xff] %vm385, %v290
  // Predicated region
  $region42: #{tpu_custom_call.1} parent=0 // pred_check
    _
  $region43: #{tpu_custom_call.1} parent=0 // pred_check_branch
    %394 = sbr.rel (0) target = $region45
  $region44: #{tpu_custom_call.1} parent=0 // pred_region
    _
  $region45: #{tpu_custom_call.1} parent=0 // pred_fallthru
    _
  // Predicated region
  $region46: #{tpu_custom_call.1} parent=0 // pred_check
    _
  $region47: #{tpu_custom_call.1} parent=0 // pred_check_branch
    %396 = sbr.rel (0) target = $region49
  $region48: #{tpu_custom_call.1} parent=0 // pred_region
    _
  $region49: #{tpu_custom_call.1} parent=0 // pred_fallthru
    _
  // Predicated region
  $region50: #{tpu_custom_call.1} parent=0 // pred_check
    _
  $region51: #{tpu_custom_call.1} parent=0 // pred_check_branch
    %398 = sbr.rel (0) target = $region53
  $region52: #{tpu_custom_call.1} parent=0 // pred_region
    _
  $region53: #{tpu_custom_call.1} parent=0 // pred_fallthru
    _
  // Predicated region
  $region54: #{tpu_custom_call.1} parent=0 // pred_check
    _
  $region55: #{tpu_custom_call.1} parent=0 // pred_check_branch
    %400 = sbr.rel (0) target = $region57
  $region56: #{tpu_custom_call.1} parent=0 // pred_region
    _
  $region57: #{tpu_custom_call.1} parent=0 // pred_fallthru
    _
  // Predicated region
  $region58: #{tpu_custom_call.1} parent=0 // pred_check
    _
  $region59: #{tpu_custom_call.1} parent=0 // pred_check_branch
    %402 = sbr.rel (0) target = $region61
  $region60: #{tpu_custom_call.1} parent=0 // pred_region
    _
  $region61: #{tpu_custom_call.1} parent=0 // pred_fallthru
    _
  // Predicated region
  $region62: #{tpu_custom_call.1} parent=0 // pred_check
    _
  $region63: #{tpu_custom_call.1} parent=0 // pred_check_branch
    %404 = sbr.rel (0) target = $region65
  $region64: #{tpu_custom_call.1} parent=0 // pred_region
    _
  $region65: #{tpu_custom_call.1} parent=0 // pred_fallthru
    _

</llo_original>
